<compile_context>
chip_gen: v7x
topology: tpu7x:2x2x1
jax: 0.10.0
libtpu: 0.0.40
codegen_flags: <defaults>
</compile_context>

<pallas_src>
import functools

import jax
import jax.numpy as jnp
from jax import lax
from jax.experimental import pallas as pl
from jax.experimental.pallas import tpu as pltpu

LN_EPS = 1e-5  # PyTorch nn.LayerNorm default


def _round_up(x, m):
    return (x + m - 1) // m * m


def _pad2d(a, rows, cols):
    r, c = a.shape
    if r == rows and c == cols:
        return a
    return jnp.pad(a, ((0, rows - r), (0, cols - c)))


def _vmem_capacity_bytes():
    try:
        return int(pltpu.get_tpu_info().vmem_capacity_bytes)
    except Exception:
        return 64 * 1024 * 1024  # conservative (v7x per-TC)


def _is_v5e():
    try:
        kind = jax.devices()[0].device_kind.lower()
        return ("v5e" in kind) or ("v5 lite" in kind) or ("v5litepod" in kind)
    except Exception:
        return False


@functools.lru_cache(maxsize=None)
def _buffered_single_supported():
    """Compile-time (lowering-only) probe: does this jax accept pl.Buffered(1)?

    Never launches a kernel; result is cached for the process lifetime.
    """
    try:
        def k(x_ref, o_ref):
            o_ref[...] = x_ref[...]

        fn = pl.pallas_call(
            k,
            out_shape=jax.ShapeDtypeStruct((8, 128), jnp.float32),
            grid=(1,),
            in_specs=[pl.BlockSpec((8, 128), lambda i: (0, 0),
                                   pipeline_mode=pl.Buffered(1))],
            out_specs=pl.BlockSpec((8, 128), lambda i: (0, 0)),
        )
        jax.jit(fn).lower(jax.ShapeDtypeStruct((8, 128), jnp.float32))
        return True
    except Exception:
        return False


def _make_kernel(d_model, mxu_bf16):
    inv_d = 1.0 / float(d_model)

    def kernel(x_ref, wd_ref, wu_ref, gamma_ref, beta_ref, o_ref):
        x = x_ref[...]                                                  # (tm, D) f32
        xm = x.astype(jnp.bfloat16) if mxu_bf16 else x
        # down-proj -> SiLU.  HID is zero-padded to HIDp lanes; pad cols stay exactly 0
        # through SiLU, and W_up^T's pad rows are zero, so they never affect y.
        h = jnp.dot(xm, wd_ref[...], preferred_element_type=jnp.float32)   # (tm, HIDp)
        h = h * jax.nn.sigmoid(h)
        hm = h.astype(jnp.bfloat16) if mxu_bf16 else h
        y = jnp.dot(hm, wu_ref[...], preferred_element_type=jnp.float32)   # (tm, D)
        # LayerNorm over the true D columns (biased variance, like torch), one pass.
        mean = jnp.sum(y, axis=-1, keepdims=True) * inv_d
        msq = jnp.sum(y * y, axis=-1, keepdims=True) * inv_d
        inv_std = lax.rsqrt(msq - mean * mean + LN_EPS)                  # (tm, 1)
        o_ref[...] = (y - mean) * (inv_std * gamma_ref[...]) + (beta_ref[...] + x)

    return kernel


def prepare_prompt2_params(w_down, w_up, gamma, beta, *, mxu_bf16=None):
    """One-time weight preprocessing (do NOT repeat per forward call).

    w_down: (HID, D), w_up: (D, HID) in torch nn.Linear layout; gamma/beta: (D,).
    """
    if mxu_bf16 is None:
        mxu_bf16 = _is_v5e()  # v5e emulates f32 matmul; feed the MXU bf16 there
    wdtype = jnp.bfloat16 if mxu_bf16 else jnp.float32
    hid, d = w_down.shape
    hid_p = _round_up(hid, 128)
    return {
        "wd_t": _pad2d(jnp.transpose(w_down).astype(wdtype), d, hid_p),  # (D, HIDp)
        "wu_t": _pad2d(jnp.transpose(w_up).astype(wdtype), hid_p, d),    # (HIDp, D)
        "gamma": gamma.reshape(1, d).astype(jnp.float32),
        "beta": beta.reshape(1, d).astype(jnp.float32),
        "mxu_bf16": bool(mxu_bf16),
    }


def _pick_tm(n_rows, d, hid_p, weight_bytes):
    vmem_cap = _vmem_capacity_bytes()
    vmem_limit = int(vmem_cap * 0.85)
    if n_rows <= 8:
        return max(1, n_rows), vmem_limit           # full-array block
    # per-row VMEM: double-buffered (tm, D) in + out tiles + ~2 f32 (tm, D) temps
    # (+ the small (tm, HIDp) bottleneck).  Weights are single-buffered -> count once.
    per_row = 6 * d * 4 + 3 * hid_p * 4
    budget = int(vmem_cap * 0.75) - weight_bytes - 2 * d * 4
    tm = max(8, budget // max(per_row, 1))
    if tm >= 128:
        tm = min(512, (tm // 128) * 128)            # MXU/lane-friendly; 512 saturates roofline
    else:
        tm = max(8, (tm // 8) * 8)
    tm = min(tm, _round_up(n_rows, 8))
    if -(-n_rows // tm) < 2:                        # guarantee >=2 grid steps (v7x: 2 TCs)
        tm = max(8, _round_up(-(-n_rows // 2), 8))
    return tm, vmem_limit


@functools.partial(jax.jit, static_argnames=("mxu_bf16",))
def _prompt2_forward_impl(x, wd_t, wu_t, gamma2d, beta2d, *, mxu_bf16):
    orig_shape = x.shape
    d = orig_shape[-1]
    hid_p = wd_t.shape[1]

    x2d = x.reshape(-1, d).astype(jnp.float32)      # leading-dim merge: no data movement
    n = x2d.shape[0]

    weight_bytes = int(wd_t.size) * wd_t.dtype.itemsize + int(wu_t.size) * wu_t.dtype.itemsize
    tm, vmem_limit = _pick_tm(n, d, hid_p, weight_bytes)
    grid = (pl.cdiv(n, tm),)                        # ragged last block: OOB reads unused, writes clipped

    kernel = _make_kernel(d, mxu_bf16)

    cost = pl.CostEstimate(
        flops=int(4 * n * d * hid_p),
        transcendentals=int(n * hid_p + n),
        bytes_accessed=int(8 * n * d + weight_bytes + 8 * d),
    )

    weight_mode = {"pipeline_mode": pl.Buffered(1)} if _buffered_single_supported() else {}

    out2d = pl.pallas_call(
        kernel,
        out_shape=jax.ShapeDtypeStruct((n, d), jnp.float32),
        grid_spec=pltpu.PrefetchScalarGridSpec(
            num_scalar_prefetch=0,
            grid=grid,
            in_specs=[
                pl.BlockSpec((tm, d), lambda i: (i, 0)),                    # x row-tile (full D width)
                pl.BlockSpec((d, hid_p), lambda i: (0, 0), **weight_mode),  # W_down^T (resident)
                pl.BlockSpec((hid_p, d), lambda i: (0, 0), **weight_mode),  # W_up^T   (resident)
                pl.BlockSpec((1, d), lambda i: (0, 0)),                     # LN gamma
                pl.BlockSpec((1, d), lambda i: (0, 0)),                     # LN beta
            ],
            out_specs=pl.BlockSpec((tm, d), lambda i: (i, 0)),
        ),
        compiler_params=pltpu.CompilerParams(
            dimension_semantics=("parallel",),
            vmem_limit_bytes=vmem_limit,
        ),
        cost_estimate=cost,
    )(x2d, wd_t, wu_t, gamma2d, beta2d)

    return out2d.reshape(orig_shape)


def prompt2_forward(inputs_embeds, params):
    """inputs_embeds: (..., D) float32; params from prepare_prompt2_params."""
    return _prompt2_forward_impl(
        inputs_embeds, params["wd_t"], params["wu_t"], params["gamma"], params["beta"],
        mxu_bf16=params["mxu_bf16"])


def prompt2_reference(x, w_down, w_up, gamma, beta):
    h = x @ w_down.T
    h = h * jax.nn.sigmoid(h)
    y = h @ w_up.T
    mean = jnp.mean(y, axis=-1, keepdims=True)
    var = jnp.mean((y - mean) ** 2, axis=-1, keepdims=True)
    y = (y - mean) / jnp.sqrt(var + LN_EPS) * gamma + beta
    return y + x


def _run_case(key, B, S, D, HID):
    kx, kwd, kwu, kg, kb = jax.random.split(key, 5)
    x = jax.random.normal(kx, (B, S, D), dtype=jnp.float32)
    w_down = jax.random.normal(kwd, (HID, D), dtype=jnp.float32) * (1.0 / float(D) ** 0.5)
    w_up = jax.random.normal(kwu, (D, HID), dtype=jnp.float32) * (1.0 / float(HID) ** 0.5)
    gamma = 1.0 + 0.1 * jax.random.normal(kg, (D,), dtype=jnp.float32)
    beta = 0.05 * jax.random.normal(kb, (D,), dtype=jnp.float32)

    params = prepare_prompt2_params(w_down, w_up, gamma, beta)   # once, at "model init"
    out = jax.block_until_ready(prompt2_forward(x, params))

    ref = prompt2_reference(x, w_down, w_up, gamma, beta)
    tol = 5e-2 if params["mxu_bf16"] else 1e-3
    assert out.shape == x.shape and out.dtype == jnp.float32
    assert jnp.allclose(out, ref, atol=tol, rtol=tol), "mismatch vs reference"


if __name__ == "__main__":
    # model_dim scaled down from 6670 for the small test; bottleneck stays 100 as in __init__.
    key = jax.random.PRNGKey(0)
    k1, k2 = jax.random.split(key)
    # Case 1: lane-aligned D, unaligned HID (exercises HID 100->128 weight padding).
    _run_case(k1, B=2, S=8, D=256, HID=100)
    # Case 2: unaligned D and ragged row count (exercises full-width D blocks + cdiv grid).
    _run_case(k2, B=1, S=13, D=200, HID=100)
    print("KERNEL_OK")
</pallas_src>

<mosaic_0001>
module attributes {stable_mosaic.version = 11 : i64} {
  func.func @kernel(%arg0: i32, %arg1: memref<8x256xf32, #tpu.memory_space<vmem>>, %arg2: memref<256x128xf32, #tpu.memory_space<vmem>>, %arg3: memref<128x256xf32, #tpu.memory_space<vmem>>, %arg4: memref<1x256xf32, #tpu.memory_space<vmem>>, %arg5: memref<1x256xf32, #tpu.memory_space<vmem>>, %arg6: memref<8x256xf32, #tpu.memory_space<vmem>>) attributes {dimension_semantics = [#tpu.dimension_semantics<parallel>], iteration_bounds = array<i64: 2>, scalar_prefetch = 0 : i64, scratch_operands = 0 : i64, tpu.core_type = #tpu.core_type<tc>, window_params = [{transform_indices = @transform_0, window_bounds = array<i64: 8, 256>}, {pipeline_mode = #tpu.pipeline_mode<synchronous>, transform_indices = @transform_1, window_bounds = array<i64: 256, 128>}, {pipeline_mode = #tpu.pipeline_mode<synchronous>, transform_indices = @transform_2, window_bounds = array<i64: 128, 256>}, {pipeline_mode = #tpu.pipeline_mode<synchronous>, transform_indices = @transform_3, window_bounds = array<i64: 1, 256>}, {pipeline_mode = #tpu.pipeline_mode<synchronous>, transform_indices = @transform_4, window_bounds = array<i64: 1, 256>}, {transform_indices = @transform_5, window_bounds = array<i64: 8, 256>}]} {
    %c0 = arith.constant 0 : index
    %c0_0 = arith.constant 0 : index
    %0 = vector.load %arg1[%c0, %c0_0] : memref<8x256xf32, #tpu.memory_space<vmem>>, vector<8x256xf32>
    %c0_1 = arith.constant 0 : index
    %c0_2 = arith.constant 0 : index
    %1 = vector.load %arg2[%c0_1, %c0_2] : memref<256x128xf32, #tpu.memory_space<vmem>>, vector<256x128xf32>
    %cst = arith.constant dense<0.000000e+00> : vector<8x128xf32>
    %2 = tpu.matmul %0, %1, %cst {dimension_numbers = #tpu.dot_dimension_numbers<[1], [0], [0], [1], [0, 0, 1, 1], [], []>} : vector<8x256xf32>, vector<256x128xf32>, vector<8x128xf32> -> vector<8x128xf32>
    %3 = arith.negf %2 : vector<8x128xf32>
    %4 = math.exp %3 : vector<8x128xf32>
    %cst_3 = arith.constant 1.000000e+00 : f32
    %5 = vector.broadcast %cst_3 : f32 to vector<8x128xf32>
    %6 = arith.addf %5, %4 : vector<8x128xf32>
    %7 = arith.divf %5, %6 : vector<8x128xf32>
    %8 = arith.mulf %2, %7 : vector<8x128xf32>
    %c0_4 = arith.constant 0 : index
    %c0_5 = arith.constant 0 : index
    %9 = vector.load %arg3[%c0_4, %c0_5] : memref<128x256xf32, #tpu.memory_space<vmem>>, vector<128x256xf32>
    %cst_6 = arith.constant dense<0.000000e+00> : vector<8x256xf32>
    %10 = tpu.matmul %8, %9, %cst_6 {dimension_numbers = #tpu.dot_dimension_numbers<[1], [0], [0], [1], [0, 0, 1, 1], [], []>} : vector<8x128xf32>, vector<128x256xf32>, vector<8x256xf32> -> vector<8x256xf32>
    %cst_7 = arith.constant dense<0.000000e+00> : vector<8xf32>
    %11 = vector.multi_reduction <add>, %10, %cst_7 [1] : vector<8x256xf32> to vector<8xf32>
    %12 = vector.shape_cast %11 : vector<8xf32> to vector<8x1xf32>
    %cst_8 = arith.constant 3.906250e-03 : f32
    %13 = vector.broadcast %cst_8 : f32 to vector<8x1xf32>
    %14 = arith.mulf %12, %13 : vector<8x1xf32>
    %15 = arith.mulf %10, %10 : vector<8x256xf32>
    %cst_9 = arith.constant dense<0.000000e+00> : vector<8xf32>
    %16 = vector.multi_reduction <add>, %15, %cst_9 [1] : vector<8x256xf32> to vector<8xf32>
    %17 = vector.shape_cast %16 : vector<8xf32> to vector<8x1xf32>
    %cst_10 = arith.constant 3.906250e-03 : f32
    %18 = vector.broadcast %cst_10 : f32 to vector<8x1xf32>
    %19 = arith.mulf %17, %18 : vector<8x1xf32>
    %20 = arith.mulf %14, %14 : vector<8x1xf32>
    %21 = arith.subf %19, %20 : vector<8x1xf32>
    %cst_11 = arith.constant 9.99999974E-6 : f32
    %22 = vector.broadcast %cst_11 : f32 to vector<8x1xf32>
    %23 = arith.addf %21, %22 : vector<8x1xf32>
    %24 = math.rsqrt %23 : vector<8x1xf32>
    %25 = vector.broadcast %14 : vector<8x1xf32> to vector<8x256xf32>
    %26 = arith.subf %10, %25 : vector<8x256xf32>
    %c0_12 = arith.constant 0 : index
    %c0_13 = arith.constant 0 : index
    %27 = vector.load %arg4[%c0_12, %c0_13] : memref<1x256xf32, #tpu.memory_space<vmem>>, vector<1x256xf32>
    %28 = vector.broadcast %24 : vector<8x1xf32> to vector<8x256xf32>
    %29 = vector.broadcast %27 : vector<1x256xf32> to vector<8x256xf32>
    %30 = arith.mulf %28, %29 : vector<8x256xf32>
    %31 = arith.mulf %26, %30 : vector<8x256xf32>
    %c0_14 = arith.constant 0 : index
    %c0_15 = arith.constant 0 : index
    %32 = vector.load %arg5[%c0_14, %c0_15] : memref<1x256xf32, #tpu.memory_space<vmem>>, vector<1x256xf32>
    %33 = vector.broadcast %32 : vector<1x256xf32> to vector<8x256xf32>
    %34 = arith.addf %33, %0 : vector<8x256xf32>
    %35 = arith.addf %31, %34 : vector<8x256xf32>
    %c0_16 = arith.constant 0 : index
    %c0_17 = arith.constant 0 : index
    %36 = vector.load %arg6[%c0_16, %c0_17] : memref<8x256xf32, #tpu.memory_space<vmem>>, vector<8x256xf32>
    tpu.vector_store %arg6[%c0_16, %c0_17], %35 {strides = array<i32>} : memref<8x256xf32, #tpu.memory_space<vmem>>, vector<8x256xf32>,
    return
  }
  func.func @transform_0(%arg0: i32) -> (i32, i32) {
    %c0_i32 = arith.constant 0 : i32
    %c0_i32_0 = arith.constant 0 : i32
    return %arg0, %c0_i32 : i32, i32
  }
  func.func @transform_1(%arg0: i32) -> (i32, i32) {
    %c0_i32 = arith.constant 0 : i32
    %c0_i32_0 = arith.constant 0 : i32
    %c0_i32_1 = arith.constant 0 : i32
    return %c0_i32, %c0_i32_0 : i32, i32
  }
  func.func @transform_2(%arg0: i32) -> (i32, i32) {
    %c0_i32 = arith.constant 0 : i32
    %c0_i32_0 = arith.constant 0 : i32
    %c0_i32_1 = arith.constant 0 : i32
    return %c0_i32, %c0_i32_0 : i32, i32
  }
  func.func @transform_3(%arg0: i32) -> (i32, i32) {
    %c0_i32 = arith.constant 0 : i32
    %c0_i32_0 = arith.constant 0 : i32
    %c0_i32_1 = arith.constant 0 : i32
    return %c0_i32, %c0_i32_0 : i32, i32
  }
  func.func @transform_4(%arg0: i32) -> (i32, i32) {
    %c0_i32 = arith.constant 0 : i32
    %c0_i32_0 = arith.constant 0 : i32
    %c0_i32_1 = arith.constant 0 : i32
    return %c0_i32, %c0_i32_0 : i32, i32
  }
  func.func @transform_5(%arg0: i32) -> (i32, i32) {
    %c0_i32 = arith.constant 0 : i32
    %c0_i32_0 = arith.constant 0 : i32
    return %arg0, %c0_i32 : i32, i32
  }
}

</mosaic_0001>

<llo_original>
// kernel: _prompt2_forward_impl.1
$region0: #{_prompt2_forward_impl.1}
  #allocation0 [shape = 'u32[]', space=smem, size = 0x4, offset = 0x4, fixed_abs, tag = 'smem constant byte address 0x4 - core index']
  #allocation1 [shape = 'u32[144,128]{1,0:T(1,128)}', space=vmem, size = 0x12000, scoped, tag = 'internal scratch']
  %s0 = inlined_call_operand.hbm [shape: f32[16,256], index: 0, kind: input, shape index: {}]
  %s1 = inlined_call_operand.hbm [shape: f32[256,128], index: 1, kind: input, shape index: {}]
  %s2 = inlined_call_operand.hbm [shape: f32[128,256], index: 2, kind: input, shape index: {}]
  %s3 = inlined_call_operand.vmem [shape: f32[1,256], index: 3, kind: input, shape index: {}]
  %s4 = inlined_call_operand.vmem [shape: f32[1,256], index: 4, kind: input, shape index: {}]
  %s5 = inlined_call_operand.hbm [shape: f32[16,256], index: 5, kind: output, shape index: {}]
  %s6 = sld [smem:[#allocation0]]
  $region65: #{_prompt2_forward_impl.1} parent=0
    _
  %s8 = ssub.s32 1, %s6
  %s9 = scalar_select 0, %s8, %s6
  $region1: #{_prompt2_forward_impl.1} parent=0
    #allocation2 [shape = 'u8[16384]{0}', space=vmem, size = 0x4000, scoped, tag = 'input window, operand 0']
    #allocation3 [shape = 's32[2]{0}', space=sflag, size = 0x8, scoped, tag = 'scoped memory for _prompt2_forward_impl.1']
    #allocation4 [shape = 's32[2]{0}', space=sflag, size = 0x8, scoped, tag = 'scoped memory for _prompt2_forward_impl.1']
    #allocation5 [shape = 'u8[131072]{0}', space=vmem, size = 0x20000, scoped, tag = 'input window, operand 1, single buffered']
    #allocation6 [shape = 's32[1]{0}', space=sflag, size = 0x4, scoped, tag = 'scoped memory for _prompt2_forward_impl.1']
    #allocation7 [shape = 'u8[131072]{0}', space=vmem, size = 0x20000, scoped, tag = 'input window, operand 2, single buffered']
    #allocation8 [shape = 'u8[16384]{0}', space=vmem, size = 0x4000, scoped, tag = 'output window, operand 0']
    %10 = vsyncpa [#allocation3], 0
    %s11 = scalar_lea.sflag [#allocation3], 1
    %12 = vsyncpa %s11, 0
    %13 = vsyncpa [#allocation6], 0
    %14 = vsyncpa [#allocation4], 0
    %s15 = scalar_lea.sflag [#allocation4], 1
    %16 = vsyncpa %s15, 0
    loop: start=0, step=1, limit=4
    $region2: #{_prompt2_forward_impl.1} parent=1 // loop_pre_header
      _
    $region3: #{_prompt2_forward_impl.1} parent=1 // loop_header
      %s18 = sphi 0, %s22
      %p19 = scmp.ge.s32.totalorder %s18, 4
      %s28 = sphi 0, %s30
      %s31 = sphi 0, %s28
      %s32 = sphi 0, %s31
      %s48 = sphi 0, %s32
      %s52 = sphi 0, %s52
      %s54 = sphi 0, %s52
      %s55 = sphi 0, %s54
      %s69 = sphi 0, %s55
      %s73 = sphi 0, %s73
      %s75 = sphi 0, %s73
      %s76 = sphi 0, %s75
      %s90 = sphi 0, %s76
      %s94 = sphi 0, %s94
      %s96 = sphi 0, %s94
      %s97 = sphi 0, %s96
      %s111 = sphi 0, %s97
      %s115 = sphi 0, %s115
      %s117 = sphi 0, %s115
      %s118 = sphi 0, %s117
      %s132 = sphi 0, %s118
      %s138 = sphi 0, %s140
      %s141 = sphi 0, %s138
      %s142 = sphi 0, %s141
      %s158 = sphi 0, %s142
    $region4: #{_prompt2_forward_impl.1} parent=1 // loop_header_branch
      %21 = sbr.rel (%p19) target = $region8
    $region5: #{_prompt2_forward_impl.1} parent=1 // loop_body
      %s23 = ssub.s32 %s18, 1
      %s24 = ssub.s32 %s18, 2
      %s25 = sadd.s32 %s18, 1
      %s26 = ssub.s32 %s18, %s25
      %p27 = scmp.eq.s32.totalorder %s26, 0
      %s29 = sadd.s32 %s28, 1
      %s30 = scalar_select %p27, %s28, %s29
      %p33 = pneg %p27
      %p34 = scmp.eq.s32.totalorder %s18, 1
      %p35 = por %p33, %p34
      %p36 = scmp.ne.s32.totalorder %s28, %s31
      %p37 = scmp.eq.s32.totalorder %s18, 0
      %p38 = por %p36, %p37
      %p39 = scmp.ne.s32.totalorder %s28, %s31
      %p40 = scmp.eq.s32.totalorder %s23, 1
      %p41 = por %p39, %p40
      %p42 = scmp.ne.s32.totalorder %s31, %s32
      %p43 = scmp.eq.s32.totalorder %s23, 0
      %p44 = por %p42, %p43
      %p45 = scmp.ne.s32.totalorder %s31, %s32
      %p46 = scmp.eq.s32.totalorder %s24, 1
      %p47 = por %p45, %p46
      %p49 = scmp.ne.s32.totalorder %s32, %s48
      %p50 = scmp.eq.s32.totalorder %s24, 0
      %p51 = por %p49, %p50
      %s53 = sadd.s32 %s52, 1
      %p56 = scmp.eq.s32.totalorder %s18, 1
      %p57 = scmp.ne.s32.totalorder %s52, %s54
      %p58 = scmp.eq.s32.totalorder %s18, 0
      %p59 = por %p57, %p58
      %p60 = scmp.ne.s32.totalorder %s52, %s54
      %p61 = scmp.eq.s32.totalorder %s23, 1
      %p62 = por %p60, %p61
      %p63 = scmp.ne.s32.totalorder %s54, %s55
      %p64 = scmp.eq.s32.totalorder %s23, 0
      %p65 = por %p63, %p64
      %p66 = scmp.ne.s32.totalorder %s54, %s55
      %p67 = scmp.eq.s32.totalorder %s24, 1
      %p68 = por %p66, %p67
      %p70 = scmp.ne.s32.totalorder %s55, %s69
      %p71 = scmp.eq.s32.totalorder %s24, 0
      %p72 = por %p70, %p71
      %s74 = sadd.s32 %s73, 1
      %p77 = scmp.eq.s32.totalorder %s18, 1
      %p78 = scmp.ne.s32.totalorder %s73, %s75
      %p79 = scmp.eq.s32.totalorder %s18, 0
      %p80 = por %p78, %p79
      %p81 = scmp.ne.s32.totalorder %s73, %s75
      %p82 = scmp.eq.s32.totalorder %s23, 1
      %p83 = por %p81, %p82
      %p84 = scmp.ne.s32.totalorder %s75, %s76
      %p85 = scmp.eq.s32.totalorder %s23, 0
      %p86 = por %p84, %p85
      %p87 = scmp.ne.s32.totalorder %s75, %s76
      %p88 = scmp.eq.s32.totalorder %s24, 1
      %p89 = por %p87, %p88
      %p91 = scmp.ne.s32.totalorder %s76, %s90
      %p92 = scmp.eq.s32.totalorder %s24, 0
      %p93 = por %p91, %p92
      %s95 = sadd.s32 %s94, 1
      %p98 = scmp.eq.s32.totalorder %s18, 1
      %p99 = scmp.ne.s32.totalorder %s94, %s96
      %p100 = scmp.eq.s32.totalorder %s18, 0
      %p101 = por %p99, %p100
      %p102 = scmp.ne.s32.totalorder %s94, %s96
      %p103 = scmp.eq.s32.totalorder %s23, 1
      %p104 = por %p102, %p103
      %p105 = scmp.ne.s32.totalorder %s96, %s97
      %p106 = scmp.eq.s32.totalorder %s23, 0
      %p107 = por %p105, %p106
      %p108 = scmp.ne.s32.totalorder %s96, %s97
      %p109 = scmp.eq.s32.totalorder %s24, 1
      %p110 = por %p108, %p109
      %p112 = scmp.ne.s32.totalorder %s97, %s111
      %p113 = scmp.eq.s32.totalorder %s24, 0
      %p114 = por %p112, %p113
      %s116 = sadd.s32 %s115, 1
      %p119 = scmp.eq.s32.totalorder %s18, 1
      %p120 = scmp.ne.s32.totalorder %s115, %s117
      %p121 = scmp.eq.s32.totalorder %s18, 0
      %p122 = por %p120, %p121
      %p123 = scmp.ne.s32.totalorder %s115, %s117
      %p124 = scmp.eq.s32.totalorder %s23, 1
      %p125 = por %p123, %p124
      %p126 = scmp.ne.s32.totalorder %s117, %s118
      %p127 = scmp.eq.s32.totalorder %s23, 0
      %p128 = por %p126, %p127
      %p129 = scmp.ne.s32.totalorder %s117, %s118
      %p130 = scmp.eq.s32.totalorder %s24, 1
      %p131 = por %p129, %p130
      %p133 = scmp.ne.s32.totalorder %s118, %s132
      %p134 = scmp.eq.s32.totalorder %s24, 0
      %p135 = por %p133, %p134
      %s136 = ssub.s32 %s18, %s25
      %p137 = scmp.eq.s32.totalorder %s136, 0
      %s139 = sadd.s32 %s138, 1
      %s140 = scalar_select %p137, %s138, %s139
      %p143 = pneg %p137
      %p144 = scmp.eq.s32.totalorder %s18, 1
      %p145 = por %p143, %p144
      %p146 = scmp.ne.s32.totalorder %s138, %s141
      %p147 = scmp.eq.s32.totalorder %s18, 0
      %p148 = por %p146, %p147
      %p149 = scmp.ne.s32.totalorder %s138, %s141
      %p150 = scmp.eq.s32.totalorder %s23, 1
      %p151 = por %p149, %p150
      %p152 = scmp.ne.s32.totalorder %s141, %s142
      %p153 = scmp.eq.s32.totalorder %s23, 0
      %p154 = por %p152, %p153
      %p155 = scmp.ne.s32.totalorder %s141, %s142
      %p156 = scmp.eq.s32.totalorder %s24, 1
      %p157 = por %p155, %p156
      %p159 = scmp.ne.s32.totalorder %s142, %s158
      %p160 = scmp.eq.s32.totalorder %s24, 0
      %p161 = por %p159, %p160
      %p162 = scmp.le.s32.totalorder 1, %s18
      %p163 = scmp.lt.s32.totalorder %s18, 3
      %p164 = pnand %p162, %p163
      %p165 = pneg %p164
      // Predicated region
      $region9: #{_prompt2_forward_impl.1} parent=5 // pred_check
        _
      $region10: #{_prompt2_forward_impl.1} parent=5 // pred_check_branch
        %167 = sbr.rel (%p164) target = $region12
      $region11: #{_prompt2_forward_impl.1} parent=5 // pred_region
        %s168 = ssub.s32 %s18, 1
        // Predicated region
        $region13: #{_prompt2_forward_impl.1} parent=11 // pred_check
          %p169 = pneg %p65
        $region14: #{_prompt2_forward_impl.1} parent=11 // pred_check_branch
          %171 = sbr.rel (%p169) target = $region16
        $region15: #{_prompt2_forward_impl.1} parent=11 // pred_region
          %s173 = ssub.s32 4096, 4096
          %174 = vsyncadd [#allocation6], %s173
          %s175 = sshll.u32 [#allocation5], 4
          %s176 = int_to_ptr.vmem [resolvable:$true] %s175
          %181 = dma.hbm_to_vmem [thread:$0]  %s1, 4096, %s176, [#allocation6], 128, 128, 8
        $region16: #{_prompt2_forward_impl.1} parent=11 // pred_fallthru
          _
        // Predicated region
        $region17: #{_prompt2_forward_impl.1} parent=11 // pred_check
          %p182 = pneg %p86
        $region18: #{_prompt2_forward_impl.1} parent=11 // pred_check_branch
          %184 = sbr.rel (%p182) target = $region20
        $region19: #{_prompt2_forward_impl.1} parent=11 // pred_region
          %s186 = ssub.s32 4096, 4096
          %187 = vsyncadd [#allocation6], %s186
          %s188 = sshll.u32 [#allocation7], 4
          %s189 = int_to_ptr.vmem [resolvable:$true] %s188
          %194 = dma.hbm_to_vmem [thread:$0]  %s2, 4096, %s189, [#allocation6], 256, 256, 16
        $region20: #{_prompt2_forward_impl.1} parent=11 // pred_fallthru
          _
        // Predicated region
        $region21: #{_prompt2_forward_impl.1} parent=11 // pred_check
          %p195 = pneg %p107
        $region22: #{_prompt2_forward_impl.1} parent=11 // pred_check_branch
          %197 = sbr.rel (%p195) target = $region24
        $region23: #{_prompt2_forward_impl.1} parent=11 // pred_region
          _
        $region24: #{_prompt2_forward_impl.1} parent=11 // pred_fallthru
          _
        // Predicated region
        $region25: #{_prompt2_forward_impl.1} parent=11 // pred_check
          %p198 = pneg %p128
        $region26: #{_prompt2_forward_impl.1} parent=11 // pred_check_branch
          %200 = sbr.rel (%p198) target = $region28
        $region27: #{_prompt2_forward_impl.1} parent=11 // pred_region
          _
        $region28: #{_prompt2_forward_impl.1} parent=11 // pred_fallthru
          _
      $region12: #{_prompt2_forward_impl.1} parent=5 // pred_fallthru
        _
      %p201 = scmp.lt.s32.totalorder %s18, 2
      // Predicated region
      $region29: #{_prompt2_forward_impl.1} parent=5 // pred_check
        %p202 = pneg %p201
      $region30: #{_prompt2_forward_impl.1} parent=5 // pred_check_branch
        %204 = sbr.rel (%p202) target = $region32
      $region31: #{_prompt2_forward_impl.1} parent=5 // pred_region
        // Predicated region
        $region33: #{_prompt2_forward_impl.1} parent=31 // pred_check
          %p205 = pneg %p38
        $region34: #{_prompt2_forward_impl.1} parent=31 // pred_check_branch
          %207 = sbr.rel (%p205) target = $region36
        $region35: #{_prompt2_forward_impl.1} parent=31 // pred_region
          %s208 = sand.u32 %s28, 1
          %s209 = scalar_lea.sflag [#allocation3], %s208
          %s210 = sand.u32 %s28, 1
          %s211 = smul.addr %s210, 16
          %s212 = scalar_lea.vmem [#allocation2], %s211
          %s214 = ssub.s32 256, 256
          %215 = vsyncadd %s209, %s214
          %s216 = smul.addr %s18, 2
          %s217 = smul.addr %s216, 128
          %s218 = scalar_lea.hbm %s0, %s217
          %s220 = sshll.u32 %s212, 4
          %s221 = int_to_ptr.vmem [resolvable:$true] %s220
          %223 = dma.hbm_to_vmem [thread:$0]  %s218, 256, %s221, %s209
        $region36: #{_prompt2_forward_impl.1} parent=31 // pred_fallthru
          _
      $region32: #{_prompt2_forward_impl.1} parent=5 // pred_fallthru
        _
      %p224 = scmp.le.s32.totalorder 1, %s18
      %p225 = scmp.lt.s32.totalorder %s18, 3
      %p226 = pnand %p224, %p225
      %p227 = pneg %p226
      // Predicated region
      $region37: #{_prompt2_forward_impl.1} parent=5 // pred_check
        _
      $region38: #{_prompt2_forward_impl.1} parent=5 // pred_check_branch
        %229 = sbr.rel (%p226) target = $region40
      $region39: #{_prompt2_forward_impl.1} parent=5 // pred_region
        %s230 = ssub.s32 %s18, 1
        %s231 = sand.u32 %s31, 1
        %s232 = scalar_lea.sflag [#allocation3], %s231
        %s233 = sand.u32 %s31, 1
        %s234 = smul.addr %s233, 16
        %s235 = scalar_lea.vmem [#allocation2], %s234
        // Predicated region
        $region41: #{_prompt2_forward_impl.1} parent=39 // pred_check
          %p236 = pneg %p44
        $region42: #{_prompt2_forward_impl.1} parent=39 // pred_check_branch
          %238 = sbr.rel (%p236) target = $region44
        $region43: #{_prompt2_forward_impl.1} parent=39 // pred_region
          %239 = dma.done %s232, 256
        $region44: #{_prompt2_forward_impl.1} parent=39 // pred_fallthru
          _
        // Predicated region
        $region45: #{_prompt2_forward_impl.1} parent=39 // pred_check
          %p240 = pneg %p65
        $region46: #{_prompt2_forward_impl.1} parent=39 // pred_check_branch
          %242 = sbr.rel (%p240) target = $region48
        $region47: #{_prompt2_forward_impl.1} parent=39 // pred_region
          %243 = dma.done [#allocation6], 4096
        $region48: #{_prompt2_forward_impl.1} parent=39 // pred_fallthru
          _
        // Predicated region
        $region49: #{_prompt2_forward_impl.1} parent=39 // pred_check
          %p244 = pneg %p86
        $region50: #{_prompt2_forward_impl.1} parent=39 // pred_check_branch
          %246 = sbr.rel (%p244) target = $region52
        $region51: #{_prompt2_forward_impl.1} parent=39 // pred_region
          %247 = dma.done [#allocation6], 4096
        $region52: #{_prompt2_forward_impl.1} parent=39 // pred_fallthru
          _
        %s248 = sand.u32 %s31, 1
        %s249 = scalar_lea.sflag [#allocation3], %s248
        %s250 = sand.u32 %s31, 1
        %s251 = smul.addr %s250, 16
        %s252 = scalar_lea.vmem [#allocation2], %s251
        %p253 = pneg %p44
        %p254 = pneg %p41
        %p255 = pneg %p65
        %p256 = pneg %p62
        %p257 = pneg %p86
        %p258 = pneg %p83
        %p259 = pneg %p107
        %p260 = pneg %p104
        %p261 = pneg %p128
        %p262 = pneg %p125
        %p263 = pneg %p154
        %p264 = pneg %p151
        %s265 = sand.u32 %s141, 1
        %s266 = scalar_lea.sflag [#allocation4], %s265
        %s267 = sand.u32 %s141, 1
        %s268 = smul.addr %s267, 16
        %s269 = scalar_lea.vmem [#allocation8], %s268
        %v270 = vld [vmem:[%s235] sm:$0xff]
        %v271 = vld [vmem:[%s235 + $0x8] sm:$0xff]
        %v272 = vld [vmem:[#allocation5] sm:$0xff]
        %v273 = vld [vmem:[#allocation5 + $0x8] sm:$0xff]
        %v274 = vld [vmem:[#allocation5 + $0x10] sm:$0xff]
        %v275 = vld [vmem:[#allocation5 + $0x18] sm:$0xff]
        %v276 = vld [vmem:[#allocation5 + $0x20] sm:$0xff]
        %v277 = vld [vmem:[#allocation5 + $0x28] sm:$0xff]
        %v278 = vld [vmem:[#allocation5 + $0x30] sm:$0xff]
        %v279 = vld [vmem:[#allocation5 + $0x38] sm:$0xff]
        %v280 = vld [vmem:[#allocation5 + $0x40] sm:$0xff]
        %v281 = vld [vmem:[#allocation5 + $0x48] sm:$0xff]
        %v282 = vld [vmem:[#allocation5 + $0x50] sm:$0xff]
        %v283 = vld [vmem:[#allocation5 + $0x58] sm:$0xff]
        %v284 = vld [vmem:[#allocation5 + $0x60] sm:$0xff]
        %v285 = vld [vmem:[#allocation5 + $0x68] sm:$0xff]
        %v286 = vld [vmem:[#allocation5 + $0x70] sm:$0xff]
        %v287 = vld [vmem:[#allocation5 + $0x78] sm:$0xff]
        %v288 = vld [vmem:[#allocation5 + $0x80] sm:$0xff]
        %v289 = vld [vmem:[#allocation5 + $0x88] sm:$0xff]
        %v290 = vld [vmem:[#allocation5 + $0x90] sm:$0xff]
        %v291 = vld [vmem:[#allocation5 + $0x98] sm:$0xff]
        %v292 = vld [vmem:[#allocation5 + $0xa0] sm:$0xff]
        %v293 = vld [vmem:[#allocation5 + $0xa8] sm:$0xff]
        %v294 = vld [vmem:[#allocation5 + $0xb0] sm:$0xff]
        %v295 = vld [vmem:[#allocation5 + $0xb8] sm:$0xff]
        %v296 = vld [vmem:[#allocation5 + $0xc0] sm:$0xff]
        %v297 = vld [vmem:[#allocation5 + $0xc8] sm:$0xff]
        %v298 = vld [vmem:[#allocation5 + $0xd0] sm:$0xff]
        %v299 = vld [vmem:[#allocation5 + $0xd8] sm:$0xff]
        %v300 = vld [vmem:[#allocation5 + $0xe0] sm:$0xff]
        %v301 = vld [vmem:[#allocation5 + $0xe8] sm:$0xff]
        %v302 = vld [vmem:[#allocation5 + $0xf0] sm:$0xff]
        %v303 = vld [vmem:[#allocation5 + $0xf8] sm:$0xff]
        %304 = vmatprep.subr.mxu0 0.0
        %305 = vmatpush1.msra.mxu0 %v272
        %306 = vmatprep.subr.mxu0 0.0
        %307 = vmatpush1.msra.mxu0 %v273
        %308 = vmatprep.subr.mxu0 0.0
        %309 = vmatpush1.msra.mxu0 %v274
        %310 = vmatprep.subr.mxu0 0.0
        %311 = vmatpush1.msra.mxu0 %v275
        %312 = vmatprep.subr.mxu0 0.0
        %313 = vmatpush1.msra.mxu0 %v276
        %314 = vmatprep.subr.mxu0 0.0
        %315 = vmatpush1.msra.mxu0 %v277
        %316 = vmatprep.subr.mxu0 0.0
        %317 = vmatpush1.msra.mxu0 %v278
        %318 = vmatprep.subr.mxu0 0.0
        %319 = vmatpush1.msra.mxu0 %v279
        %320 = vmatprep.subr.mxu0 0.0
        %321 = vmatpush1.msra.mxu0 %v280
        %322 = vmatprep.subr.mxu0 0.0
        %323 = vmatpush1.msra.mxu0 %v281
        %324 = vmatprep.subr.mxu0 0.0
        %325 = vmatpush1.msra.mxu0 %v282
        %326 = vmatprep.subr.mxu0 0.0
        %327 = vmatpush1.msra.mxu0 %v283
        %328 = vmatprep.subr.mxu0 0.0
        %329 = vmatpush1.msra.mxu0 %v284
        %330 = vmatprep.subr.mxu0 0.0
        %331 = vmatpush1.msra.mxu0 %v285
        %332 = vmatprep.subr.mxu0 0.0
        %333 = vmatpush1.msra.mxu0 %v286
        %334 = vmatprep.subr.mxu0 0.0
        %335 = vmatpush1.msra.mxu0 %v287
        %336 = vmatprep.subr.mxu0 0.0
        %337 = vmatpush1.msra.mxu0 %v288
        %338 = vmatprep.subr.mxu0 0.0
        %339 = vmatpush1.msra.mxu0 %v289
        %340 = vmatprep.subr.mxu0 0.0
        %341 = vmatpush1.msra.mxu0 %v290
        %342 = vmatprep.subr.mxu0 0.0
        %343 = vmatpush1.msra.mxu0 %v291
        %344 = vmatprep.subr.mxu0 0.0
        %345 = vmatpush1.msra.mxu0 %v292
        %346 = vmatprep.subr.mxu0 0.0
        %347 = vmatpush1.msra.mxu0 %v293
        %348 = vmatprep.subr.mxu0 0.0
        %349 = vmatpush1.msra.mxu0 %v294
        %350 = vmatprep.subr.mxu0 0.0
        %351 = vmatpush1.msra.mxu0 %v295
        %352 = vmatprep.subr.mxu0 0.0
        %353 = vmatpush1.msra.mxu0 %v296
        %354 = vmatprep.subr.mxu0 0.0
        %355 = vmatpush1.msra.mxu0 %v297
        %356 = vmatprep.subr.mxu0 0.0
        %357 = vmatpush1.msra.mxu0 %v298
        %358 = vmatprep.subr.mxu0 0.0
        %359 = vmatpush1.msra.mxu0 %v299
        %360 = vmatprep.subr.mxu0 0.0
        %361 = vmatpush1.msra.mxu0 %v300
        %362 = vmatprep.subr.mxu0 0.0
        %363 = vmatpush1.msra.mxu0 %v301
        %364 = vmatprep.subr.mxu0 0.0
        %365 = vmatpush1.msra.mxu0 %v302
        %366 = vmatprep.subr.mxu0 0.0
        %367 = vmatpush1.msra.mxu0 %v303
        %368 = vmatprep.mubr.f32.mxu0 %v271
        %369 = vmatmul.mubr.f32.gmra.mrb[0].mxu0 %v270
        %v370 = vpop.f32.mrb[0].mxu0
        %v371 = vadd.f32 0.0, %v370
        %v372 = vpop.f32.mrb[0].mxu0
        %373 = vdwg.mxu0
        %v374 = vxor.u32 %v371, 2147483648
        %v375 = vmul.f32 %v374, 1.442695
        %v376 = vpow.pop %v375
        %v377 = vadd.f32 %v376, 1.0
        %v378 = vrcp.pop %v377
        %v379 = vmul.f32 1.0, %v378
        %v380 = vmul.f32 %v371, %v379
        %v381 = vld [vmem:[#allocation7] sm:$0xff]
        %v382 = vld [vmem:[#allocation7 + $0x8] sm:$0xff]
        %v383 = vld [vmem:[#allocation7 + $0x10] sm:$0xff]
        %v384 = vld [vmem:[#allocation7 + $0x18] sm:$0xff]
        %v385 = vld [vmem:[#allocation7 + $0x20] sm:$0xff]
        %v386 = vld [vmem:[#allocation7 + $0x28] sm:$0xff]
        %v387 = vld [vmem:[#allocation7 + $0x30] sm:$0xff]
        %v388 = vld [vmem:[#allocation7 + $0x38] sm:$0xff]
        %v389 = vld [vmem:[#allocation7 + $0x40] sm:$0xff]
        %v390 = vld [vmem:[#allocation7 + $0x48] sm:$0xff]
        %v391 = vld [vmem:[#allocation7 + $0x50] sm:$0xff]
        %v392 = vld [vmem:[#allocation7 + $0x58] sm:$0xff]
        %v393 = vld [vmem:[#allocation7 + $0x60] sm:$0xff]
        %v394 = vld [vmem:[#allocation7 + $0x68] sm:$0xff]
        %v395 = vld [vmem:[#allocation7 + $0x70] sm:$0xff]
        %v396 = vld [vmem:[#allocation7 + $0x78] sm:$0xff]
        %v397 = vld [vmem:[#allocation7 + $0x80] sm:$0xff]
        %v398 = vld [vmem:[#allocation7 + $0x88] sm:$0xff]
        %v399 = vld [vmem:[#allocation7 + $0x90] sm:$0xff]
        %v400 = vld [vmem:[#allocation7 + $0x98] sm:$0xff]
        %v401 = vld [vmem:[#allocation7 + $0xa0] sm:$0xff]
        %v402 = vld [vmem:[#allocation7 + $0xa8] sm:$0xff]
        %v403 = vld [vmem:[#allocation7 + $0xb0] sm:$0xff]
        %v404 = vld [vmem:[#allocation7 + $0xb8] sm:$0xff]
        %v405 = vld [vmem:[#allocation7 + $0xc0] sm:$0xff]
        %v406 = vld [vmem:[#allocation7 + $0xc8] sm:$0xff]
        %v407 = vld [vmem:[#allocation7 + $0xd0] sm:$0xff]
        %v408 = vld [vmem:[#allocation7 + $0xd8] sm:$0xff]
        %v409 = vld [vmem:[#allocation7 + $0xe0] sm:$0xff]
        %v410 = vld [vmem:[#allocation7 + $0xe8] sm:$0xff]
        %v411 = vld [vmem:[#allocation7 + $0xf0] sm:$0xff]
        %v412 = vld [vmem:[#allocation7 + $0xf8] sm:$0xff]
        %413 = vmatprep.subr.mxu0 %v382
        %414 = vmatpush1.msra.mxu0 %v381
        %415 = vmatprep.subr.mxu0 %v384
        %416 = vmatpush1.msra.mxu0 %v383
        %417 = vmatprep.subr.mxu0 %v386
        %418 = vmatpush1.msra.mxu0 %v385
        %419 = vmatprep.subr.mxu0 %v388
        %420 = vmatpush1.msra.mxu0 %v387
        %421 = vmatprep.subr.mxu0 %v390
        %422 = vmatpush1.msra.mxu0 %v389
        %423 = vmatprep.subr.mxu0 %v392
        %424 = vmatpush1.msra.mxu0 %v391
        %425 = vmatprep.subr.mxu0 %v394
        %426 = vmatpush1.msra.mxu0 %v393
        %427 = vmatprep.subr.mxu0 %v396
        %428 = vmatpush1.msra.mxu0 %v395
        %429 = vmatprep.subr.mxu0 %v398
        %430 = vmatpush1.msra.mxu0 %v397
        %431 = vmatprep.subr.mxu0 %v400
        %432 = vmatpush1.msra.mxu0 %v399
        %433 = vmatprep.subr.mxu0 %v402
        %434 = vmatpush1.msra.mxu0 %v401
        %435 = vmatprep.subr.mxu0 %v404
        %436 = vmatpush1.msra.mxu0 %v403
        %437 = vmatprep.subr.mxu0 %v406
        %438 = vmatpush1.msra.mxu0 %v405
        %439 = vmatprep.subr.mxu0 %v408
        %440 = vmatpush1.msra.mxu0 %v407
        %441 = vmatprep.subr.mxu0 %v410
        %442 = vmatpush1.msra.mxu0 %v409
        %443 = vmatprep.subr.mxu0 %v412
        %444 = vmatpush1.msra.mxu0 %v411
        %445 = vmatprep.subr.mxu0 0.0
        %446 = vmatpush1.msra.mxu0 0.0
        %447 = vmatprep.subr.mxu0 0.0
        %448 = vmatpush1.msra.mxu0 0.0
        %449 = vmatprep.subr.mxu0 0.0
        %450 = vmatpush1.msra.mxu0 0.0
        %451 = vmatprep.subr.mxu0 0.0
        %452 = vmatpush1.msra.mxu0 0.0
        %453 = vmatprep.subr.mxu0 0.0
        %454 = vmatpush1.msra.mxu0 0.0
        %455 = vmatprep.subr.mxu0 0.0
        %456 = vmatpush1.msra.mxu0 0.0
        %457 = vmatprep.subr.mxu0 0.0
        %458 = vmatpush1.msra.mxu0 0.0
        %459 = vmatprep.subr.mxu0 0.0
        %460 = vmatpush1.msra.mxu0 0.0
        %461 = vmatprep.subr.mxu0 0.0
        %462 = vmatpush1.msra.mxu0 0.0
        %463 = vmatprep.subr.mxu0 0.0
        %464 = vmatpush1.msra.mxu0 0.0
        %465 = vmatprep.subr.mxu0 0.0
        %466 = vmatpush1.msra.mxu0 0.0
        %467 = vmatprep.subr.mxu0 0.0
        %468 = vmatpush1.msra.mxu0 0.0
        %469 = vmatprep.subr.mxu0 0.0
        %470 = vmatpush1.msra.mxu0 0.0
        %471 = vmatprep.subr.mxu0 0.0
        %472 = vmatpush1.msra.mxu0 0.0
        %473 = vmatprep.subr.mxu0 0.0
        %474 = vmatpush1.msra.mxu0 0.0
        %475 = vmatprep.subr.mxu0 0.0
        %476 = vmatpush1.msra.mxu0 0.0
        %477 = vmatprep.mubr.f32.mxu0 0.0
        %478 = vmatmul.mubr.f32.gmra.mrb[0].mxu0 %v380
        %v479 = vpop.f32.mrb[0].mxu0
        %v480 = vadd.f32 0.0, %v479
        %v481 = vpop.f32.mrb[0].mxu0
        %v482 = vadd.f32 0.0, %v481
        %483 = vdwg.mxu0
        %v484 = vadd.f32 %v480, %v482
        %485 = vadd.xlane.f32.xlu0 %v484
        %v486 = vpop.xlane.xlu0 %485
        %v487 = vmul.f32 %v486, 0.00390625
        %v488 = vmul.f32 %v480, %v480
        %v489 = vmul.f32 %v482, %v482
        %v490 = vadd.f32 %v488, %v489
        %491 = vadd.xlane.f32.xlu0 %v490
        %v492 = vpop.xlane.xlu0 %491
        %v493 = vmul.f32 %v492, 0.00390625
        %v494 = vmul.f32 %v487, %v487
        %v495 = vsub.f32 %v493, %v494
        %v496 = vadd.f32 %v495, 1e-05
        %v497 = vrsqrt.pop %v496
        %v498 = vsub.f32 %v480, %v487
        %v499 = vsub.f32 %v482, %v487
        %v500 = vld [vmem:[%s3] sm:$0x3]
        %v502 = vlaneseq
        %v503 = vshrl.u32 %v502, 7
        %v504 = vsub.s32 0, %v503
        %v505 = vrot.slane %v500, %v504
        %v506 = vlaneseq
        %v507 = vshrl.u32 %v506, 7
        %v508 = vsub.s32 1, %v507
        %v509 = vrot.slane %v500, %v508
        %v512 = vmul.f32 %v497, %v505
        %v513 = vmul.f32 %v497, %v509
        %v514 = vmul.f32 %v498, %v512
        %v515 = vmul.f32 %v499, %v513
        %v516 = vld [vmem:[%s4] sm:$0x3]
        %v518 = vlaneseq
        %v519 = vshrl.u32 %v518, 7
        %v520 = vsub.s32 0, %v519
        %v521 = vrot.slane %v516, %v520
        %v522 = vlaneseq
        %v523 = vshrl.u32 %v522, 7
        %v524 = vsub.s32 1, %v523
        %v525 = vrot.slane %v516, %v524
        %v528 = vadd.f32 %v521, %v270
        %v529 = vadd.f32 %v525, %v271
        %v530 = vadd.f32 %v514, %v528
        %v531 = vadd.f32 %v515, %v529
        %532 = vst [vmem:[%s269] sm:$0xff] %v530
        %533 = vst [vmem:[%s269 + $0x8] sm:$0xff] %v531
        %s534 = sand.u32 %s141, 1
        %s535 = scalar_lea.sflag [#allocation4], %s534
        %s536 = sand.u32 %s141, 1
        %s537 = smul.addr %s536, 16
        %s538 = scalar_lea.vmem [#allocation8], %s537
        // Predicated region
        $region53: #{_prompt2_forward_impl.1} parent=39 // pred_check
          %p539 = pneg %p151
        $region54: #{_prompt2_forward_impl.1} parent=39 // pred_check_branch
          %541 = sbr.rel (%p539) target = $region56
        $region55: #{_prompt2_forward_impl.1} parent=39 // pred_region
          %s543 = ssub.s32 256, 256
          %544 = vsyncadd %s535, %s543
          %s545 = smul.addr %s23, 2
          %s546 = smul.addr %s545, 128
          %s547 = scalar_lea.hbm %s5, %s546
          %s549 = sshll.u32 %s538, 4
          %s550 = int_to_ptr.vmem [resolvable:$true] %s549
          %552 = dma.vmem_to_hbm [thread:$0]  %s550, 256, %s547, %s535
        $region56: #{_prompt2_forward_impl.1} parent=39 // pred_fallthru
          _
      $region40: #{_prompt2_forward_impl.1} parent=5 // pred_fallthru
        _
      %p553 = scmp.le.s32.totalorder 2, %s18
      // Predicated region
      $region57: #{_prompt2_forward_impl.1} parent=5 // pred_check
        %p554 = pneg %p553
      $region58: #{_prompt2_forward_impl.1} parent=5 // pred_check_branch
        %556 = sbr.rel (%p554) target = $region60
      $region59: #{_prompt2_forward_impl.1} parent=5 // pred_region
        %s557 = ssub.s32 %s18, 2
        // Predicated region
        $region61: #{_prompt2_forward_impl.1} parent=59 // pred_check
          %p558 = pneg %p157
        $region62: #{_prompt2_forward_impl.1} parent=59 // pred_check_branch
          %560 = sbr.rel (%p558) target = $region64
        $region63: #{_prompt2_forward_impl.1} parent=59 // pred_region
          %s561 = sand.u32 %s142, 1
          %s562 = scalar_lea.sflag [#allocation4], %s561
          %s563 = sand.u32 %s142, 1
          %s564 = smul.addr %s563, 16
          %s565 = scalar_lea.vmem [#allocation8], %s564
          %566 = dma.done %s562, 256
        $region64: #{_prompt2_forward_impl.1} parent=59 // pred_fallthru
          _
      $region60: #{_prompt2_forward_impl.1} parent=5 // pred_fallthru
        _
    $region6: #{_prompt2_forward_impl.1} parent=1 // loop_footer
      %s22 = sadd.s32 1, %s18
    $region7: #{_prompt2_forward_impl.1} parent=1 // loop_footer_branch
      %17 = sbr.rel target = $region3
    $region8: #{_prompt2_forward_impl.1} parent=1 // loop_exit
      _
    %567 = vsyncpa [#allocation3], 1
    %s568 = scalar_lea.sflag [#allocation3], 1
    %569 = vsyncpa %s568, 1
    %570 = vsyncpa [#allocation6], 1
    %571 = vsyncpa [#allocation4], 1
    %s572 = scalar_lea.sflag [#allocation4], 1
    %573 = vsyncpa %s572, 1

</llo_original>
